<compile_context>
chip_gen: v7x
topology: tpu7x:2x2x1
jax: 0.10.0
libtpu: 0.0.40
codegen_flags: <defaults>
</compile_context>

<pallas_src>
import jax
import jax.numpy as jnp
from jax.experimental import pallas as pl
from jax.experimental.pallas import tpu as pltpu

HIDDEN1 = 512
HIDDEN2 = 256
LANE = 128
SUBLANE = 8
# Conservative VMEM budget so default scoped limits (16 MiB v5e / 32 MiB v6e,v7x) are enough.
_VMEM_BUDGET = 12 * 1024 * 1024


def _round_up(x, m):
    return ((x + m - 1) // m) * m


def _cdiv(a, b):
    return -(-a // b)


def _mlp_kernel(x_ref, w1_ref, b1_ref, w2_ref, b2_ref, w3_ref, b3_ref, o_ref):
    # In-kernel cast of the x tile to the MXU dtype (avoids a wrapper-side HBM pass over x).
    x = x_ref[...].astype(w1_ref.dtype)
    # Layer 1: (TB, in) @ (in, 512) -- bf16 MXU inputs, f32 accumulate.
    h1 = jnp.dot(x, w1_ref[...], preferred_element_type=jnp.float32)
    h1 = jnp.maximum(h1 + b1_ref[...], 0.0)            # bias + ReLU in f32 on the VPU
    # Layer 2: (TB, 512) @ (512, 256) -- the well-shaped, MXU-bound middle layer.
    h2 = jnp.dot(h1.astype(w2_ref.dtype), w2_ref[...],
                 preferred_element_type=jnp.float32)
    h2 = jnp.maximum(h2 + b2_ref[...], 0.0)
    # Layer 3: (TB, 256) @ (256, output_len) -- narrow N; MXU pads internally, and the
    # unpadded output keeps HBM writes to output_len*4 bytes/row (no zero padding stored).
    out = jnp.dot(h2.astype(w3_ref.dtype), w3_ref[...],
                  preferred_element_type=jnp.float32) + b3_ref[...]
    o_ref[...] = out.astype(o_ref.dtype)


def _pick_batch_tile(B, block_b, input_len, output_len):
    """Choose (tb, num_tiles, b_pad): VMEM-budgeted, multiple of 8, even tile count when tiled."""
    # Resident weights/biases (double-buffered by the pipeliner).
    weight_bytes = 2 * (2 * (input_len * HIDDEN1 + HIDDEN1 * HIDDEN2 + HIDDEN2 * output_len)
                        + 4 * (HIDDEN1 + HIDDEN2 + output_len))
    # Per-row VMEM: double-buffered x/out tiles + f32 intermediates + their bf16 copies.
    row_bytes = (2 * 4 * input_len                 # x tile (f32), double-buffered
                 + 4 * HIDDEN1 + 2 * HIDDEN1       # h1 f32 + bf16 copy
                 + 4 * HIDDEN2 + 2 * HIDDEN2       # h2 f32 + bf16 copy
                 + 2 * 4 * max(output_len, LANE))  # out tile (lane-padded in VMEM), double-buffered
    tb_cap = max(SUBLANE,
                 ((max(_VMEM_BUDGET - weight_bytes, row_bytes * SUBLANE)) // row_bytes)
                 // SUBLANE * SUBLANE)

    tb = min(_round_up(int(block_b), SUBLANE), tb_cap, _round_up(B, SUBLANE))
    tb = max(SUBLANE, _round_up(tb, SUBLANE))
    num_tiles = _cdiv(B, tb)
    # v7x megacore: with >1 tile, prefer an even, balanced tile count so both TCs stay busy.
    if num_tiles > 1 and num_tiles % 2 == 1:
        num_tiles += 1
        tb = _round_up(_cdiv(B, num_tiles), SUBLANE)
        num_tiles = _cdiv(B, tb)
    b_pad = num_tiles * tb
    return tb, num_tiles, b_pad


def plddt_mlp(x, params, *, block_b=1024, compute_dtype=jnp.bfloat16):
    """x: (B, input_len).  params: dict of w1,b1,w2,b2,w3,b3 (weights stored (in, out))."""
    w1, b1, w2, b2, w3, b3 = (params[k] for k in ("w1", "b1", "w2", "b2", "w3", "b3"))
    # Defensive: accept 1-D biases (e.g. straight from a PyTorch state_dict).
    b1, b2, b3 = (jnp.reshape(b, (1, -1)) for b in (b1, b2, b3))

    B, input_len = x.shape
    output_len = w3.shape[1]

    tb, num_tiles, b_pad = _pick_batch_tile(B, block_b, input_len, output_len)
    if b_pad != B:
        x = jnp.pad(x, ((0, b_pad - B), (0, 0)))

    # Weight casts stay in the wrapper (tiny, VMEM-resident); x is cast inside the kernel.
    w1c = w1.astype(compute_dtype)
    w2c = w2.astype(compute_dtype)
    w3c = w3.astype(compute_dtype)
    b1f = b1.astype(jnp.float32)
    b2f = b2.astype(jnp.float32)
    b3f = b3.astype(jnp.float32)

    def resident(arr):
        # Constant index map: DMA'd once, stays VMEM-resident across batch tiles.
        return pl.BlockSpec(arr.shape, lambda i: (0, 0))

    flops = 2 * b_pad * (input_len * HIDDEN1 + HIDDEN1 * HIDDEN2 + HIDDEN2 * output_len)
    bytes_accessed = (
        x.size * x.dtype.itemsize
        + sum(a.size * a.dtype.itemsize for a in (w1c, b1f, w2c, b2f, w3c, b3f))
        + b_pad * output_len * 4
    )

    out = pl.pallas_call(
        _mlp_kernel,
        out_shape=jax.ShapeDtypeStruct((b_pad, output_len), jnp.float32),
        grid_spec=pltpu.PrefetchScalarGridSpec(
            num_scalar_prefetch=0,
            grid=(num_tiles,),
            in_specs=[
                pl.BlockSpec((tb, input_len), lambda i: (i, 0)),   # x tile
                resident(w1c), resident(b1f),
                resident(w2c), resident(b2f),
                resident(w3c), resident(b3f),
            ],
            # Last block dim equals the full array dim -> allowed even though < 128; the HBM
            # region per tile is contiguous, so the writeback DMA stays dense.
            out_specs=pl.BlockSpec((tb, output_len), lambda i: (i, 0)),
        ),
        compiler_params=pltpu.CompilerParams(
            # Batch axis is embarrassingly parallel -> shards across TCs on v7x megacore.
            dimension_semantics=("parallel",),
        ),
        cost_estimate=pl.CostEstimate(
            flops=flops, transcendentals=0, bytes_accessed=bytes_accessed),
    )(x, w1c, b1f, w2c, b2f, w3c, b3f)

    # Only a (cheap, rows-only) slice remains, and only when the batch needed padding.
    return out if b_pad == B else out[:B]


def init_params(key, input_len, output_len, dtype=jnp.float32):
    """Deterministic synthetic parameters (shapes match nn.Linear, stored transposed)."""
    ks = jax.random.split(key, 6)
    scale1 = 1.0 / jnp.sqrt(jnp.asarray(input_len, dtype))
    scale2 = 1.0 / jnp.sqrt(jnp.asarray(HIDDEN1, dtype))
    scale3 = 1.0 / jnp.sqrt(jnp.asarray(HIDDEN2, dtype))
    return {
        "w1": jax.random.uniform(ks[0], (input_len, HIDDEN1), dtype, -scale1, scale1),
        "b1": jax.random.uniform(ks[1], (1, HIDDEN1), dtype, -scale1, scale1),
        "w2": jax.random.uniform(ks[2], (HIDDEN1, HIDDEN2), dtype, -scale2, scale2),
        "b2": jax.random.uniform(ks[3], (1, HIDDEN2), dtype, -scale2, scale2),
        "w3": jax.random.uniform(ks[4], (HIDDEN2, output_len), dtype, -scale3, scale3),
        "b3": jax.random.uniform(ks[5], (1, output_len), dtype, -scale3, scale3),
    }


def _reference_emulated(x, p, compute_dtype=jnp.bfloat16):
    """Pure-JAX reference matching the kernel's math (bf16 MXU inputs, f32 accumulate)."""
    cd = compute_dtype
    h1 = jnp.dot(x.astype(cd), p["w1"].astype(cd), preferred_element_type=jnp.float32)
    h1 = jnp.maximum(h1 + p["b1"].astype(jnp.float32), 0.0)
    h2 = jnp.dot(h1.astype(cd), p["w2"].astype(cd), preferred_element_type=jnp.float32)
    h2 = jnp.maximum(h2 + p["b2"].astype(jnp.float32), 0.0)
    return (jnp.dot(h2.astype(cd), p["w3"].astype(cd), preferred_element_type=jnp.float32)
            + p["b3"].astype(jnp.float32))


def _reference_f32(x, p):
    h1 = jnp.maximum(x @ p["w1"] + p["b1"], 0.0)
    h2 = jnp.maximum(h1 @ p["w2"] + p["b2"], 0.0)
    return h2 @ p["w3"] + p["b3"]


if __name__ == "__main__":
    key = jax.random.PRNGKey(0)
    k_x, k_x2, k_p = jax.random.split(key, 3)

    input_len = 32
    output_len = 8
    params = init_params(k_p, input_len, output_len)

    # Small case: single batch tile, no padding of any kind.
    batch = 8
    x = jax.random.normal(k_x, (batch, input_len), jnp.float32)
    out = jax.block_until_ready(plddt_mlp(x, params))
    assert out.shape == (batch, output_len), out.shape
    ref = _reference_emulated(x, params)
    assert jnp.allclose(out, ref, atol=2e-3, rtol=2e-3), "mismatch vs bf16-emulated reference"
    assert jnp.allclose(out, _reference_f32(x, params), atol=1e-1, rtol=1e-1), \
        "mismatch vs f32 reference (sanity; bf16 MXU inputs, f32 accumulate)"

    # Larger, non-divisible batch: exercises batch tiling, row padding, and the even-tile
    # rebalance for v7x (300 rows @ block_b=128 -> 4 tiles of 80 rows).
    batch2 = 300
    x2 = jax.random.normal(k_x2, (batch2, input_len), jnp.float32)
    out2 = jax.block_until_ready(plddt_mlp(x2, params, block_b=128))
    assert out2.shape == (batch2, output_len), out2.shape
    ref2 = _reference_emulated(x2, params)
    assert jnp.allclose(out2, ref2, atol=2e-3, rtol=2e-3), \
        "mismatch vs bf16-emulated reference (tiled)"

    print("KERNEL_OK")
</pallas_src>

<mosaic_0001>
module attributes {stable_mosaic.version = 11 : i64} {
  func.func @_mlp_kernel(%arg0: i32, %arg1: memref<8x32xf32, #tpu.memory_space<vmem>>, %arg2: memref<32x512xbf16, #tpu.memory_space<vmem>>, %arg3: memref<1x512xf32, #tpu.memory_space<vmem>>, %arg4: memref<512x256xbf16, #tpu.memory_space<vmem>>, %arg5: memref<1x256xf32, #tpu.memory_space<vmem>>, %arg6: memref<256x8xbf16, #tpu.memory_space<vmem>>, %arg7: memref<1x8xf32, #tpu.memory_space<vmem>>, %arg8: memref<8x8xf32, #tpu.memory_space<vmem>>) attributes {dimension_semantics = [#tpu.dimension_semantics<parallel>], iteration_bounds = array<i64: 1>, scalar_prefetch = 0 : i64, scratch_operands = 0 : i64, tpu.core_type = #tpu.core_type<tc>, window_params = [{transform_indices = @transform_0, window_bounds = array<i64: 8, 32>}, {pipeline_mode = #tpu.pipeline_mode<synchronous>, transform_indices = @transform_1, window_bounds = array<i64: 32, 512>}, {pipeline_mode = #tpu.pipeline_mode<synchronous>, transform_indices = @transform_2, window_bounds = array<i64: 1, 512>}, {pipeline_mode = #tpu.pipeline_mode<synchronous>, transform_indices = @transform_3, window_bounds = array<i64: 512, 256>}, {pipeline_mode = #tpu.pipeline_mode<synchronous>, transform_indices = @transform_4, window_bounds = array<i64: 1, 256>}, {pipeline_mode = #tpu.pipeline_mode<synchronous>, transform_indices = @transform_5, window_bounds = array<i64: 256, 8>}, {pipeline_mode = #tpu.pipeline_mode<synchronous>, transform_indices = @transform_6, window_bounds = array<i64: 1, 8>}, {transform_indices = @transform_7, window_bounds = array<i64: 8, 8>}]} {
    %c0 = arith.constant 0 : index
    %c0_0 = arith.constant 0 : index
    %0 = vector.load %arg1[%c0, %c0_0] : memref<8x32xf32, #tpu.memory_space<vmem>>, vector<8x32xf32>
    %1 = arith.truncf %0 : vector<8x32xf32> to vector<8x32xbf16>
    %c0_1 = arith.constant 0 : index
    %c0_2 = arith.constant 0 : index
    %2 = vector.load %arg2[%c0_1, %c0_2] : memref<32x512xbf16, #tpu.memory_space<vmem>>, vector<32x512xbf16>
    %cst = arith.constant dense<0.000000e+00> : vector<8x512xf32>
    %3 = tpu.matmul %1, %2, %cst {dimension_numbers = #tpu.dot_dimension_numbers<[1], [0], [0], [1], [0, 0, 1, 1], [], []>} : vector<8x32xbf16>, vector<32x512xbf16>, vector<8x512xf32> -> vector<8x512xf32>
    %c0_3 = arith.constant 0 : index
    %c0_4 = arith.constant 0 : index
    %4 = vector.load %arg3[%c0_3, %c0_4] : memref<1x512xf32, #tpu.memory_space<vmem>>, vector<1x512xf32>
    %5 = vector.broadcast %4 : vector<1x512xf32> to vector<8x512xf32>
    %6 = arith.addf %3, %5 : vector<8x512xf32>
    %cst_5 = arith.constant 0.000000e+00 : f32
    %7 = vector.broadcast %cst_5 : f32 to vector<8x512xf32>
    %8 = arith.maximumf %6, %7 : vector<8x512xf32>
    %9 = arith.truncf %8 : vector<8x512xf32> to vector<8x512xbf16>
    %c0_6 = arith.constant 0 : index
    %c0_7 = arith.constant 0 : index
    %10 = vector.load %arg4[%c0_6, %c0_7] : memref<512x256xbf16, #tpu.memory_space<vmem>>, vector<512x256xbf16>
    %cst_8 = arith.constant dense<0.000000e+00> : vector<8x256xf32>
    %11 = tpu.matmul %9, %10, %cst_8 {dimension_numbers = #tpu.dot_dimension_numbers<[1], [0], [0], [1], [0, 0, 1, 1], [], []>} : vector<8x512xbf16>, vector<512x256xbf16>, vector<8x256xf32> -> vector<8x256xf32>
    %c0_9 = arith.constant 0 : index
    %c0_10 = arith.constant 0 : index
    %12 = vector.load %arg5[%c0_9, %c0_10] : memref<1x256xf32, #tpu.memory_space<vmem>>, vector<1x256xf32>
    %13 = vector.broadcast %12 : vector<1x256xf32> to vector<8x256xf32>
    %14 = arith.addf %11, %13 : vector<8x256xf32>
    %cst_11 = arith.constant 0.000000e+00 : f32
    %15 = vector.broadcast %cst_11 : f32 to vector<8x256xf32>
    %16 = arith.maximumf %14, %15 : vector<8x256xf32>
    %17 = arith.truncf %16 : vector<8x256xf32> to vector<8x256xbf16>
    %c0_12 = arith.constant 0 : index
    %c0_13 = arith.constant 0 : index
    %18 = vector.load %arg6[%c0_12, %c0_13] : memref<256x8xbf16, #tpu.memory_space<vmem>>, vector<256x8xbf16>
    %cst_14 = arith.constant dense<0.000000e+00> : vector<8x8xf32>
    %19 = tpu.matmul %17, %18, %cst_14 {dimension_numbers = #tpu.dot_dimension_numbers<[1], [0], [0], [1], [0, 0, 1, 1], [], []>} : vector<8x256xbf16>, vector<256x8xbf16>, vector<8x8xf32> -> vector<8x8xf32>
    %c0_15 = arith.constant 0 : index
    %c0_16 = arith.constant 0 : index
    %20 = vector.load %arg7[%c0_15, %c0_16] : memref<1x8xf32, #tpu.memory_space<vmem>>, vector<1x8xf32>
    %21 = vector.broadcast %20 : vector<1x8xf32> to vector<8x8xf32>
    %22 = arith.addf %19, %21 : vector<8x8xf32>
    %c0_17 = arith.constant 0 : index
    %c0_18 = arith.constant 0 : index
    %23 = vector.load %arg8[%c0_17, %c0_18] : memref<8x8xf32, #tpu.memory_space<vmem>>, vector<8x8xf32>
    tpu.vector_store %arg8[%c0_17, %c0_18], %22 {strides = array<i32>} : memref<8x8xf32, #tpu.memory_space<vmem>>, vector<8x8xf32>,
    return
  }
  func.func @transform_0(%arg0: i32) -> (i32, i32) {
    %c0_i32 = arith.constant 0 : i32
    %c0_i32_0 = arith.constant 0 : i32
    return %arg0, %c0_i32 : i32, i32
  }
  func.func @transform_1(%arg0: i32) -> (i32, i32) {
    %c0_i32 = arith.constant 0 : i32
    %c0_i32_0 = arith.constant 0 : i32
    %c0_i32_1 = arith.constant 0 : i32
    return %c0_i32, %c0_i32_0 : i32, i32
  }
  func.func @transform_2(%arg0: i32) -> (i32, i32) {
    %c0_i32 = arith.constant 0 : i32
    %c0_i32_0 = arith.constant 0 : i32
    %c0_i32_1 = arith.constant 0 : i32
    return %c0_i32, %c0_i32_0 : i32, i32
  }
  func.func @transform_3(%arg0: i32) -> (i32, i32) {
    %c0_i32 = arith.constant 0 : i32
    %c0_i32_0 = arith.constant 0 : i32
    %c0_i32_1 = arith.constant 0 : i32
    return %c0_i32, %c0_i32_0 : i32, i32
  }
  func.func @transform_4(%arg0: i32) -> (i32, i32) {
    %c0_i32 = arith.constant 0 : i32
    %c0_i32_0 = arith.constant 0 : i32
    %c0_i32_1 = arith.constant 0 : i32
    return %c0_i32, %c0_i32_0 : i32, i32
  }
  func.func @transform_5(%arg0: i32) -> (i32, i32) {
    %c0_i32 = arith.constant 0 : i32
    %c0_i32_0 = arith.constant 0 : i32
    %c0_i32_1 = arith.constant 0 : i32
    return %c0_i32, %c0_i32_0 : i32, i32
  }
  func.func @transform_6(%arg0: i32) -> (i32, i32) {
    %c0_i32 = arith.constant 0 : i32
    %c0_i32_0 = arith.constant 0 : i32
    %c0_i32_1 = arith.constant 0 : i32
    return %c0_i32, %c0_i32_0 : i32, i32
  }
  func.func @transform_7(%arg0: i32) -> (i32, i32) {
    %c0_i32 = arith.constant 0 : i32
    %c0_i32_0 = arith.constant 0 : i32
    return %arg0, %c0_i32 : i32, i32
  }
}

</mosaic_0001>

<llo_original>
// kernel: tpu_custom_call.1
$region0: #{tpu_custom_call.1}
  #allocation0 [shape = 'u32[]', space=smem, size = 0x4, offset = 0x4, fixed_abs, tag = 'smem constant byte address 0x4 - core index']
  #allocation1 [shape = 'u32[144,128]{1,0:T(1,128)}', space=vmem, size = 0x12000, scoped, tag = 'internal scratch']
  %s0 = inlined_call_operand.vmem [shape: f32[8,32], index: 0, kind: input, shape index: {}]
  %s1 = inlined_call_operand.vmem [shape: bf16[32,512], index: 1, kind: input, shape index: {}]
  %s2 = inlined_call_operand.vmem [shape: f32[1,512], index: 2, kind: input, shape index: {}]
  %s3 = inlined_call_operand.hbm [shape: bf16[512,256], index: 3, kind: input, shape index: {}]
  %s4 = inlined_call_operand.vmem [shape: f32[1,256], index: 4, kind: input, shape index: {}]
  %s5 = inlined_call_operand.vmem [shape: bf16[256,8], index: 5, kind: input, shape index: {}]
  %s6 = inlined_call_operand.vmem [shape: f32[1,8], index: 6, kind: input, shape index: {}]
  %s7 = inlined_call_operand.hbm [shape: f32[8,8], index: 7, kind: output, shape index: {}]
  %s8 = sld [smem:[#allocation0]]
  $region42: #{tpu_custom_call.1} parent=0
    _
  %s10 = ssub.s32 1, %s8
  %s11 = scalar_select 0, %s10, %s8
  $region1: #{tpu_custom_call.1} parent=0
    #allocation2 [shape = 'u8[262144]{0}', space=vmem, size = 0x40000, scoped, tag = 'input window, operand 3, single buffered']
    #allocation3 [shape = 's32[1]{0}', space=sflag, size = 0x4, scoped, tag = 'scoped memory for tpu_custom_call.1']
    #allocation4 [shape = 's32[1]{0}', space=sflag, size = 0x4, scoped, tag = 'scoped memory for tpu_custom_call.1']
    #allocation5 [shape = 'u8[4096]{0}', space=vmem, size = 0x1000, scoped, tag = 'output window, operand 0, single buffered']
    %12 = vsyncpa [#allocation3], 0
    %13 = vsyncpa [#allocation4], 0
    // Predicated region
    $region2: #{tpu_custom_call.1} parent=1 // pred_check
      _
    $region3: #{tpu_custom_call.1} parent=1 // pred_check_branch
      %15 = sbr.rel (0) target = $region5
    $region4: #{tpu_custom_call.1} parent=1 // pred_region
      _
    $region5: #{tpu_custom_call.1} parent=1 // pred_fallthru
      _
    // Predicated region
    $region6: #{tpu_custom_call.1} parent=1 // pred_check
      _
    $region7: #{tpu_custom_call.1} parent=1 // pred_check_branch
      %17 = sbr.rel (0) target = $region9
    $region8: #{tpu_custom_call.1} parent=1 // pred_region
      _
    $region9: #{tpu_custom_call.1} parent=1 // pred_fallthru
      _
    // Predicated region
    $region10: #{tpu_custom_call.1} parent=1 // pred_check
      _
    $region11: #{tpu_custom_call.1} parent=1 // pred_check_branch
      %19 = sbr.rel (0) target = $region13
    $region12: #{tpu_custom_call.1} parent=1 // pred_region
      _
    $region13: #{tpu_custom_call.1} parent=1 // pred_fallthru
      _
    // Predicated region
    $region14: #{tpu_custom_call.1} parent=1 // pred_check
      _
    $region15: #{tpu_custom_call.1} parent=1 // pred_check_branch
      %21 = sbr.rel (0) target = $region17
    $region16: #{tpu_custom_call.1} parent=1 // pred_region
      %s23 = ssub.s32 8192, 8192
      %24 = vsyncadd [#allocation3], %s23
      %s25 = sshll.u32 [#allocation2], 4
      %s26 = int_to_ptr.vmem [resolvable:$true] %s25
      %31 = dma.hbm_to_vmem [thread:$0]  %s3, 8192, %s26, [#allocation3], 128, 128, 8
    $region17: #{tpu_custom_call.1} parent=1 // pred_fallthru
      _
    // Predicated region
    $region18: #{tpu_custom_call.1} parent=1 // pred_check
      _
    $region19: #{tpu_custom_call.1} parent=1 // pred_check_branch
      %33 = sbr.rel (0) target = $region21
    $region20: #{tpu_custom_call.1} parent=1 // pred_region
      _
    $region21: #{tpu_custom_call.1} parent=1 // pred_fallthru
      _
    // Predicated region
    $region22: #{tpu_custom_call.1} parent=1 // pred_check
      _
    $region23: #{tpu_custom_call.1} parent=1 // pred_check_branch
      %35 = sbr.rel (0) target = $region25
    $region24: #{tpu_custom_call.1} parent=1 // pred_region
      _
    $region25: #{tpu_custom_call.1} parent=1 // pred_fallthru
      _
    // Predicated region
    $region26: #{tpu_custom_call.1} parent=1 // pred_check
      _
    $region27: #{tpu_custom_call.1} parent=1 // pred_check_branch
      %37 = sbr.rel (0) target = $region29
    $region28: #{tpu_custom_call.1} parent=1 // pred_region
      _
    $region29: #{tpu_custom_call.1} parent=1 // pred_fallthru
      _
    // Predicated region
    $region30: #{tpu_custom_call.1} parent=1 // pred_check
      _
    $region31: #{tpu_custom_call.1} parent=1 // pred_check_branch
      %39 = sbr.rel (0) target = $region33
    $region32: #{tpu_custom_call.1} parent=1 // pred_region
      %40 = dma.done [#allocation3], 8192
    $region33: #{tpu_custom_call.1} parent=1 // pred_fallthru
      _
    %v42 = vld [vmem:[%s0] sm:$0xff]
    %v43 = vpack.c.bf16 %v42, %v42
    %v44 = vld [vmem:[%s1] sm:$0xff]
    %v45 = vld [vmem:[%s1 + $0x8] sm:$0xff]
    %v46 = vld [vmem:[%s1 + $0x10] sm:$0xff]
    %v47 = vld [vmem:[%s1 + $0x18] sm:$0xff]
    %v48 = vld [vmem:[%s1 + $0x20] sm:$0xff]
    %v49 = vld [vmem:[%s1 + $0x28] sm:$0xff]
    %v50 = vld [vmem:[%s1 + $0x30] sm:$0xff]
    %v51 = vld [vmem:[%s1 + $0x38] sm:$0xff]
    %v52 = vld [vmem:[%s2] sm:$0xf]
    %v54 = vlaneseq
    %v55 = vshrl.u32 %v54, 7
    %v56 = vsub.s32 0, %v55
    %v57 = vrot.slane %v52, %v56
    %v58 = vlaneseq
    %v59 = vshrl.u32 %v58, 7
    %v60 = vsub.s32 1, %v59
    %v61 = vrot.slane %v52, %v60
    %v62 = vlaneseq
    %v63 = vshrl.u32 %v62, 7
    %v64 = vsub.s32 2, %v63
    %v65 = vrot.slane %v52, %v64
    %v66 = vlaneseq
    %v67 = vshrl.u32 %v66, 7
    %v68 = vsub.s32 3, %v67
    %v69 = vrot.slane %v52, %v68
    %v82 = vunpack.c.l.b16 %v44
    %v83 = vunpack.c.h.b16 %v44
    %v84 = vunpack.c.l.b16 %v45
    %v85 = vunpack.c.h.b16 %v45
    %v86 = vunpack.c.l.b16 %v46
    %v87 = vunpack.c.h.b16 %v46
    %v88 = vunpack.c.l.b16 %v47
    %v89 = vunpack.c.h.b16 %v47
    %v90 = vunpack.c.l.b16 %v48
    %v91 = vunpack.c.h.b16 %v48
    %v92 = vunpack.c.l.b16 %v49
    %v93 = vunpack.c.h.b16 %v49
    %v94 = vunpack.c.l.b16 %v50
    %v95 = vunpack.c.h.b16 %v50
    %v96 = vunpack.c.l.b16 %v51
    %v97 = vunpack.c.h.b16 %v51
    %v98 = vpack.c.b16 %v86, %v82
    %v99 = vpack.c.b16 %v87, %v83
    %v100 = vpack.c.b16 %v88, %v84
    %v101 = vpack.c.b16 %v89, %v85
    %v102 = vpack.c.b16 %v94, %v90
    %v103 = vpack.c.b16 %v95, %v91
    %v104 = vpack.c.b16 %v96, %v92
    %v105 = vpack.c.b16 %v97, %v93
    %vm114 = vcmask 261120
    %v116 = vsel %vm114, %v43, 0
    %118 = vmatprep.subr.bf16.mxu0 %v99
    %119 = vmatpush1.bf16.msra.mxu0 %v98
    %120 = vmatprep.subr.bf16.mxu0 %v103
    %121 = vmatpush1.bf16.msra.mxu0 %v102
    %122 = vmatprep.subr.bf16.mxu0 0
    %123 = vmatpush1.bf16.msra.mxu0 0
    %124 = vmatprep.subr.bf16.mxu0 0
    %125 = vmatpush1.bf16.msra.mxu0 0
    %126 = vmatprep.subr.bf16.mxu0 0
    %127 = vmatpush1.bf16.msra.mxu0 0
    %128 = vmatprep.subr.bf16.mxu0 0
    %129 = vmatpush1.bf16.msra.mxu0 0
    %130 = vmatprep.subr.bf16.mxu0 0
    %131 = vmatpush1.bf16.msra.mxu0 0
    %132 = vmatprep.subr.bf16.mxu0 0
    %133 = vmatpush1.bf16.msra.mxu0 0
    %134 = vmatprep.subr.bf16.mxu0 0
    %135 = vmatpush1.bf16.msra.mxu0 0
    %136 = vmatprep.subr.bf16.mxu0 0
    %137 = vmatpush1.bf16.msra.mxu0 0
    %138 = vmatprep.subr.bf16.mxu0 0
    %139 = vmatpush1.bf16.msra.mxu0 0
    %140 = vmatprep.subr.bf16.mxu0 0
    %141 = vmatpush1.bf16.msra.mxu0 0
    %142 = vmatprep.subr.bf16.mxu0 0
    %143 = vmatpush1.bf16.msra.mxu0 0
    %144 = vmatprep.subr.bf16.mxu0 0
    %145 = vmatpush1.bf16.msra.mxu0 0
    %146 = vmatprep.subr.bf16.mxu0 0
    %147 = vmatpush1.bf16.msra.mxu0 0
    %148 = vmatprep.subr.bf16.mxu0 0
    %149 = vmatpush1.bf16.msra.mxu0 0
    %150 = vmatprep.mubr.bf16.mxu0 0
    %151 = vmatmul.mubr.bf16.gmra.mrb[0].mxu0 %v116
    %v152 = vpop.f32.mrb[0].mxu0
    %v153 = vadd.f32 %v57, %v152
    %v154 = vpop.f32.mrb[0].mxu0
    %v155 = vadd.f32 %v61, %v154
    %v156 = vpop.f32.mrb[0].mxu0
    %v157 = vpop.f32.mrb[0].mxu0
    %158 = vdwg.mxu0
    %159 = vmatprep.subr.bf16.mxu0 %v101
    %160 = vmatpush1.bf16.msra.mxu0 %v100
    %161 = vmatprep.subr.bf16.mxu0 %v105
    %162 = vmatpush1.bf16.msra.mxu0 %v104
    %163 = vmatprep.subr.bf16.mxu0 0
    %164 = vmatpush1.bf16.msra.mxu0 0
    %165 = vmatprep.subr.bf16.mxu0 0
    %166 = vmatpush1.bf16.msra.mxu0 0
    %167 = vmatprep.subr.bf16.mxu0 0
    %168 = vmatpush1.bf16.msra.mxu0 0
    %169 = vmatprep.subr.bf16.mxu0 0
    %170 = vmatpush1.bf16.msra.mxu0 0
    %171 = vmatprep.subr.bf16.mxu0 0
    %172 = vmatpush1.bf16.msra.mxu0 0
    %173 = vmatprep.subr.bf16.mxu0 0
    %174 = vmatpush1.bf16.msra.mxu0 0
    %175 = vmatprep.subr.bf16.mxu0 0
    %176 = vmatpush1.bf16.msra.mxu0 0
    %177 = vmatprep.subr.bf16.mxu0 0
    %178 = vmatpush1.bf16.msra.mxu0 0
    %179 = vmatprep.subr.bf16.mxu0 0
    %180 = vmatpush1.bf16.msra.mxu0 0
    %181 = vmatprep.subr.bf16.mxu0 0
    %182 = vmatpush1.bf16.msra.mxu0 0
    %183 = vmatprep.subr.bf16.mxu0 0
    %184 = vmatpush1.bf16.msra.mxu0 0
    %185 = vmatprep.subr.bf16.mxu0 0
    %186 = vmatpush1.bf16.msra.mxu0 0
    %187 = vmatprep.subr.bf16.mxu0 0
    %188 = vmatpush1.bf16.msra.mxu0 0
    %189 = vmatprep.subr.bf16.mxu0 0
    %190 = vmatpush1.bf16.msra.mxu0 0
    %191 = vmatprep.mubr.bf16.mxu0 0
    %192 = vmatmul.mubr.bf16.gmra.mrb[0].mxu0 %v116
    %v193 = vpop.f32.mrb[0].mxu0
    %v194 = vadd.f32 %v65, %v193
    %v195 = vpop.f32.mrb[0].mxu0
    %v196 = vadd.f32 %v69, %v195
    %v197 = vpop.f32.mrb[0].mxu0
    %v198 = vpop.f32.mrb[0].mxu0
    %199 = vdwg.mxu0
    %v200 = vmax.f32 %v153, 0.0
    %v201 = vmax.f32 %v155, 0.0
    %v202 = vmax.f32 %v194, 0.0
    %v203 = vmax.f32 %v196, 0.0
    %v204 = vpack.c.bf16 %v200, %v200
    %v205 = vpack.c.bf16 %v201, %v201
    %v206 = vpack.c.bf16 %v202, %v202
    %v207 = vpack.c.bf16 %v203, %v203
    %v208 = vld [vmem:[#allocation2] sm:$0xff]
    %v209 = vld [vmem:[#allocation2 + $0x8] sm:$0xff]
    %v210 = vld [vmem:[#allocation2 + $0x10] sm:$0xff]
    %v211 = vld [vmem:[#allocation2 + $0x18] sm:$0xff]
    %v212 = vld [vmem:[#allocation2 + $0x20] sm:$0xff]
    %v213 = vld [vmem:[#allocation2 + $0x28] sm:$0xff]
    %v214 = vld [vmem:[#allocation2 + $0x30] sm:$0xff]
    %v215 = vld [vmem:[#allocation2 + $0x38] sm:$0xff]
    %v216 = vld [vmem:[#allocation2 + $0x40] sm:$0xff]
    %v217 = vld [vmem:[#allocation2 + $0x48] sm:$0xff]
    %v218 = vld [vmem:[#allocation2 + $0x50] sm:$0xff]
    %v219 = vld [vmem:[#allocation2 + $0x58] sm:$0xff]
    %v220 = vld [vmem:[#allocation2 + $0x60] sm:$0xff]
    %v221 = vld [vmem:[#allocation2 + $0x68] sm:$0xff]
    %v222 = vld [vmem:[#allocation2 + $0x70] sm:$0xff]
    %v223 = vld [vmem:[#allocation2 + $0x78] sm:$0xff]
    %v224 = vld [vmem:[#allocation2 + $0x80] sm:$0xff]
    %v225 = vld [vmem:[#allocation2 + $0x88] sm:$0xff]
    %v226 = vld [vmem:[#allocation2 + $0x90] sm:$0xff]
    %v227 = vld [vmem:[#allocation2 + $0x98] sm:$0xff]
    %v228 = vld [vmem:[#allocation2 + $0xa0] sm:$0xff]
    %v229 = vld [vmem:[#allocation2 + $0xa8] sm:$0xff]
    %v230 = vld [vmem:[#allocation2 + $0xb0] sm:$0xff]
    %v231 = vld [vmem:[#allocation2 + $0xb8] sm:$0xff]
    %v232 = vld [vmem:[#allocation2 + $0xc0] sm:$0xff]
    %v233 = vld [vmem:[#allocation2 + $0xc8] sm:$0xff]
    %v234 = vld [vmem:[#allocation2 + $0xd0] sm:$0xff]
    %v235 = vld [vmem:[#allocation2 + $0xd8] sm:$0xff]
    %v236 = vld [vmem:[#allocation2 + $0xe0] sm:$0xff]
    %v237 = vld [vmem:[#allocation2 + $0xe8] sm:$0xff]
    %v238 = vld [vmem:[#allocation2 + $0xf0] sm:$0xff]
    %v239 = vld [vmem:[#allocation2 + $0xf8] sm:$0xff]
    %v240 = vld [vmem:[#allocation2 + $0x100] sm:$0xff]
    %v241 = vld [vmem:[#allocation2 + $0x108] sm:$0xff]
    %v242 = vld [vmem:[#allocation2 + $0x110] sm:$0xff]
    %v243 = vld [vmem:[#allocation2 + $0x118] sm:$0xff]
    %v244 = vld [vmem:[#allocation2 + $0x120] sm:$0xff]
    %v245 = vld [vmem:[#allocation2 + $0x128] sm:$0xff]
    %v246 = vld [vmem:[#allocation2 + $0x130] sm:$0xff]
    %v247 = vld [vmem:[#allocation2 + $0x138] sm:$0xff]
    %v248 = vld [vmem:[#allocation2 + $0x140] sm:$0xff]
    %v249 = vld [vmem:[#allocation2 + $0x148] sm:$0xff]
    %v250 = vld [vmem:[#allocation2 + $0x150] sm:$0xff]
    %v251 = vld [vmem:[#allocation2 + $0x158] sm:$0xff]
    %v252 = vld [vmem:[#allocation2 + $0x160] sm:$0xff]
    %v253 = vld [vmem:[#allocation2 + $0x168] sm:$0xff]
    %v254 = vld [vmem:[#allocation2 + $0x170] sm:$0xff]
    %v255 = vld [vmem:[#allocation2 + $0x178] sm:$0xff]
    %v256 = vld [vmem:[#allocation2 + $0x180] sm:$0xff]
    %v257 = vld [vmem:[#allocation2 + $0x188] sm:$0xff]
    %v258 = vld [vmem:[#allocation2 + $0x190] sm:$0xff]
    %v259 = vld [vmem:[#allocation2 + $0x198] sm:$0xff]
    %v260 = vld [vmem:[#allocation2 + $0x1a0] sm:$0xff]
    %v261 = vld [vmem:[#allocation2 + $0x1a8] sm:$0xff]
    %v262 = vld [vmem:[#allocation2 + $0x1b0] sm:$0xff]
    %v263 = vld [vmem:[#allocation2 + $0x1b8] sm:$0xff]
    %v264 = vld [vmem:[#allocation2 + $0x1c0] sm:$0xff]
    %v265 = vld [vmem:[#allocation2 + $0x1c8] sm:$0xff]
    %v266 = vld [vmem:[#allocation2 + $0x1d0] sm:$0xff]
    %v267 = vld [vmem:[#allocation2 + $0x1d8] sm:$0xff]
    %v268 = vld [vmem:[#allocation2 + $0x1e0] sm:$0xff]
    %v269 = vld [vmem:[#allocation2 + $0x1e8] sm:$0xff]
    %v270 = vld [vmem:[#allocation2 + $0x1f0] sm:$0xff]
    %v271 = vld [vmem:[#allocation2 + $0x1f8] sm:$0xff]
    %v272 = vld [vmem:[%s4] sm:$0x3]
    %v274 = vlaneseq
    %v275 = vshrl.u32 %v274, 7
    %v276 = vsub.s32 0, %v275
    %v277 = vrot.slane %v272, %v276
    %v278 = vlaneseq
    %v279 = vshrl.u32 %v278, 7
    %v280 = vsub.s32 1, %v279
    %v281 = vrot.slane %v272, %v280
    %v348 = vunpack.c.l.b16 %v208
    %v349 = vunpack.c.h.b16 %v208
    %v350 = vunpack.c.l.b16 %v209
    %v351 = vunpack.c.h.b16 %v209
    %v352 = vunpack.c.l.b16 %v210
    %v353 = vunpack.c.h.b16 %v210
    %v354 = vunpack.c.l.b16 %v211
    %v355 = vunpack.c.h.b16 %v211
    %v356 = vunpack.c.l.b16 %v212
    %v357 = vunpack.c.h.b16 %v212
    %v358 = vunpack.c.l.b16 %v213
    %v359 = vunpack.c.h.b16 %v213
    %v360 = vunpack.c.l.b16 %v214
    %v361 = vunpack.c.h.b16 %v214
    %v362 = vunpack.c.l.b16 %v215
    %v363 = vunpack.c.h.b16 %v215
    %v364 = vunpack.c.l.b16 %v216
    %v365 = vunpack.c.h.b16 %v216
    %v366 = vunpack.c.l.b16 %v217
    %v367 = vunpack.c.h.b16 %v217
    %v368 = vunpack.c.l.b16 %v218
    %v369 = vunpack.c.h.b16 %v218
    %v370 = vunpack.c.l.b16 %v219
    %v371 = vunpack.c.h.b16 %v219
    %v372 = vunpack.c.l.b16 %v220
    %v373 = vunpack.c.h.b16 %v220
    %v374 = vunpack.c.l.b16 %v221
    %v375 = vunpack.c.h.b16 %v221
    %v376 = vunpack.c.l.b16 %v222
    %v377 = vunpack.c.h.b16 %v222
    %v378 = vunpack.c.l.b16 %v223
    %v379 = vunpack.c.h.b16 %v223
    %v380 = vunpack.c.l.b16 %v224
    %v381 = vunpack.c.h.b16 %v224
    %v382 = vunpack.c.l.b16 %v225
    %v383 = vunpack.c.h.b16 %v225
    %v384 = vunpack.c.l.b16 %v226
    %v385 = vunpack.c.h.b16 %v226
    %v386 = vunpack.c.l.b16 %v227
    %v387 = vunpack.c.h.b16 %v227
    %v388 = vunpack.c.l.b16 %v228
    %v389 = vunpack.c.h.b16 %v228
    %v390 = vunpack.c.l.b16 %v229
    %v391 = vunpack.c.h.b16 %v229
    %v392 = vunpack.c.l.b16 %v230
    %v393 = vunpack.c.h.b16 %v230
    %v394 = vunpack.c.l.b16 %v231
    %v395 = vunpack.c.h.b16 %v231
    %v396 = vunpack.c.l.b16 %v232
    %v397 = vunpack.c.h.b16 %v232
    %v398 = vunpack.c.l.b16 %v233
    %v399 = vunpack.c.h.b16 %v233
    %v400 = vunpack.c.l.b16 %v234
    %v401 = vunpack.c.h.b16 %v234
    %v402 = vunpack.c.l.b16 %v235
    %v403 = vunpack.c.h.b16 %v235
    %v404 = vunpack.c.l.b16 %v236
    %v405 = vunpack.c.h.b16 %v236
    %v406 = vunpack.c.l.b16 %v237
    %v407 = vunpack.c.h.b16 %v237
    %v408 = vunpack.c.l.b16 %v238
    %v409 = vunpack.c.h.b16 %v238
    %v410 = vunpack.c.l.b16 %v239
    %v411 = vunpack.c.h.b16 %v239
    %v412 = vunpack.c.l.b16 %v240
    %v413 = vunpack.c.h.b16 %v240
    %v414 = vunpack.c.l.b16 %v241
    %v415 = vunpack.c.h.b16 %v241
    %v416 = vunpack.c.l.b16 %v242
    %v417 = vunpack.c.h.b16 %v242
    %v418 = vunpack.c.l.b16 %v243
    %v419 = vunpack.c.h.b16 %v243
    %v420 = vunpack.c.l.b16 %v244
    %v421 = vunpack.c.h.b16 %v244
    %v422 = vunpack.c.l.b16 %v245
    %v423 = vunpack.c.h.b16 %v245
    %v424 = vunpack.c.l.b16 %v246
    %v425 = vunpack.c.h.b16 %v246
    %v426 = vunpack.c.l.b16 %v247
    %v427 = vunpack.c.h.b16 %v247
    %v428 = vunpack.c.l.b16 %v248
    %v429 = vunpack.c.h.b16 %v248
    %v430 = vunpack.c.l.b16 %v249
    %v431 = vunpack.c.h.b16 %v249
    %v432 = vunpack.c.l.b16 %v250
    %v433 = vunpack.c.h.b16 %v250
    %v434 = vunpack.c.l.b16 %v251
    %v435 = vunpack.c.h.b16 %v251
    %v436 = vunpack.c.l.b16 %v252
    %v437 = vunpack.c.h.b16 %v252
    %v438 = vunpack.c.l.b16 %v253
    %v439 = vunpack.c.h.b16 %v253
    %v440 = vunpack.c.l.b16 %v254
    %v441 = vunpack.c.h.b16 %v254
    %v442 = vunpack.c.l.b16 %v255
    %v443 = vunpack.c.h.b16 %v255
    %v444 = vunpack.c.l.b16 %v256
    %v445 = vunpack.c.h.b16 %v256
    %v446 = vunpack.c.l.b16 %v257
    %v447 = vunpack.c.h.b16 %v257
    %v448 = vunpack.c.l.b16 %v258
    %v449 = vunpack.c.h.b16 %v258
    %v450 = vunpack.c.l.b16 %v259
    %v451 = vunpack.c.h.b16 %v259
    %v452 = vunpack.c.l.b16 %v260
    %v453 = vunpack.c.h.b16 %v260
    %v454 = vunpack.c.l.b16 %v261
    %v455 = vunpack.c.h.b16 %v261
    %v456 = vunpack.c.l.b16 %v262
    %v457 = vunpack.c.h.b16 %v262
    %v458 = vunpack.c.l.b16 %v263
    %v459 = vunpack.c.h.b16 %v263
    %v460 = vunpack.c.l.b16 %v264
    %v461 = vunpack.c.h.b16 %v264
    %v462 = vunpack.c.l.b16 %v265
    %v463 = vunpack.c.h.b16 %v265
    %v464 = vunpack.c.l.b16 %v266
    %v465 = vunpack.c.h.b16 %v266
    %v466 = vunpack.c.l.b16 %v267
    %v467 = vunpack.c.h.b16 %v267
    %v468 = vunpack.c.l.b16 %v268
    %v469 = vunpack.c.h.b16 %v268
    %v470 = vunpack.c.l.b16 %v269
    %v471 = vunpack.c.h.b16 %v269
    %v472 = vunpack.c.l.b16 %v270
    %v473 = vunpack.c.h.b16 %v270
    %v474 = vunpack.c.l.b16 %v271
    %v475 = vunpack.c.h.b16 %v271
    %v476 = vpack.c.b16 %v350, %v348
    %v477 = vpack.c.b16 %v351, %v349
    %v478 = vpack.c.b16 %v354, %v352
    %v479 = vpack.c.b16 %v355, %v353
    %v480 = vpack.c.b16 %v358, %v356
    %v481 = vpack.c.b16 %v359, %v357
    %v482 = vpack.c.b16 %v362, %v360
    %v483 = vpack.c.b16 %v363, %v361
    %v484 = vpack.c.b16 %v366, %v364
    %v485 = vpack.c.b16 %v367, %v365
    %v486 = vpack.c.b16 %v370, %v368
    %v487 = vpack.c.b16 %v371, %v369
    %v488 = vpack.c.b16 %v374, %v372
    %v489 = vpack.c.b16 %v375, %v373
    %v490 = vpack.c.b16 %v378, %v376
    %v491 = vpack.c.b16 %v379, %v377
    %v492 = vpack.c.b16 %v382, %v380
    %v493 = vpack.c.b16 %v383, %v381
    %v494 = vpack.c.b16 %v386, %v384
    %v495 = vpack.c.b16 %v387, %v385
    %v496 = vpack.c.b16 %v390, %v388
    %v497 = vpack.c.b16 %v391, %v389
    %v498 = vpack.c.b16 %v394, %v392
    %v499 = vpack.c.b16 %v395, %v393
    %v500 = vpack.c.b16 %v398, %v396
    %v501 = vpack.c.b16 %v399, %v397
    %v502 = vpack.c.b16 %v402, %v400
    %v503 = vpack.c.b16 %v403, %v401
    %v504 = vpack.c.b16 %v406, %v404
    %v505 = vpack.c.b16 %v407, %v405
    %v506 = vpack.c.b16 %v410, %v408
    %v507 = vpack.c.b16 %v411, %v409
    %v508 = vpack.c.b16 %v414, %v412
    %v509 = vpack.c.b16 %v415, %v413
    %v510 = vpack.c.b16 %v418, %v416
    %v511 = vpack.c.b16 %v419, %v417
    %v512 = vpack.c.b16 %v422, %v420
    %v513 = vpack.c.b16 %v423, %v421
    %v514 = vpack.c.b16 %v426, %v424
    %v515 = vpack.c.b16 %v427, %v425
    %v516 = vpack.c.b16 %v430, %v428
    %v517 = vpack.c.b16 %v431, %v429
    %v518 = vpack.c.b16 %v434, %v432
    %v519 = vpack.c.b16 %v435, %v433
    %v520 = vpack.c.b16 %v438, %v436
    %v521 = vpack.c.b16 %v439, %v437
    %v522 = vpack.c.b16 %v442, %v440
    %v523 = vpack.c.b16 %v443, %v441
    %v524 = vpack.c.b16 %v446, %v444
    %v525 = vpack.c.b16 %v447, %v445
    %v526 = vpack.c.b16 %v450, %v448
    %v527 = vpack.c.b16 %v451, %v449
    %v528 = vpack.c.b16 %v454, %v452
    %v529 = vpack.c.b16 %v455, %v453
    %v530 = vpack.c.b16 %v458, %v456
    %v531 = vpack.c.b16 %v459, %v457
    %v532 = vpack.c.b16 %v462, %v460
    %v533 = vpack.c.b16 %v463, %v461
    %v534 = vpack.c.b16 %v466, %v464
    %v535 = vpack.c.b16 %v467, %v465
    %v536 = vpack.c.b16 %v470, %v468
    %v537 = vpack.c.b16 %v471, %v469
    %v538 = vpack.c.b16 %v474, %v472
    %v539 = vpack.c.b16 %v475, %v473
    %604 = vmatprep.subr.bf16.mxu0 %v477
    %605 = vmatpush1.bf16.msra.mxu0 %v476
    %606 = vmatprep.subr.bf16.mxu0 %v479
    %607 = vmatpush1.bf16.msra.mxu0 %v478
    %608 = vmatprep.subr.bf16.mxu0 %v481
    %609 = vmatpush1.bf16.msra.mxu0 %v480
    %610 = vmatprep.subr.bf16.mxu0 %v483
    %611 = vmatpush1.bf16.msra.mxu0 %v482
    %612 = vmatprep.subr.bf16.mxu0 %v485
    %613 = vmatpush1.bf16.msra.mxu0 %v484
    %614 = vmatprep.subr.bf16.mxu0 %v487
    %615 = vmatpush1.bf16.msra.mxu0 %v486
    %616 = vmatprep.subr.bf16.mxu0 %v489
    %617 = vmatpush1.bf16.msra.mxu0 %v488
    %618 = vmatprep.subr.bf16.mxu0 %v491
    %619 = vmatpush1.bf16.msra.mxu0 %v490
    %620 = vmatprep.subr.bf16.mxu0 %v493
    %621 = vmatpush1.bf16.msra.mxu0 %v492
    %622 = vmatprep.subr.bf16.mxu0 %v495
    %623 = vmatpush1.bf16.msra.mxu0 %v494
    %624 = vmatprep.subr.bf16.mxu0 %v497
    %625 = vmatpush1.bf16.msra.mxu0 %v496
    %626 = vmatprep.subr.bf16.mxu0 %v499
    %627 = vmatpush1.bf16.msra.mxu0 %v498
    %628 = vmatprep.subr.bf16.mxu0 %v501
    %629 = vmatpush1.bf16.msra.mxu0 %v500
    %630 = vmatprep.subr.bf16.mxu0 %v503
    %631 = vmatpush1.bf16.msra.mxu0 %v502
    %632 = vmatprep.subr.bf16.mxu0 %v505
    %633 = vmatpush1.bf16.msra.mxu0 %v504
    %634 = vmatprep.subr.bf16.mxu0 %v507
    %635 = vmatpush1.bf16.msra.mxu0 %v506
    %636 = vmatprep.mubr.bf16.mxu0 %v205
    %637 = vmatmul.mubr.bf16.gmra.mrb[0].mxu0 %v204
    %v638 = vpop.f32.mrb[0].mxu0
    %v639 = vadd.f32 %v277, %v638
    %v640 = vpop.f32.mrb[0].mxu0
    %v641 = vadd.f32 %v281, %v640
    %v642 = vpop.f32.mrb[0].mxu0
    %v643 = vpop.f32.mrb[0].mxu0
    %644 = vdwg.mxu0
    %645 = vmatprep.subr.bf16.mxu0 %v509
    %646 = vmatpush1.bf16.msra.mxu0 %v508
    %647 = vmatprep.subr.bf16.mxu0 %v511
    %648 = vmatpush1.bf16.msra.mxu0 %v510
    %649 = vmatprep.subr.bf16.mxu0 %v513
    %650 = vmatpush1.bf16.msra.mxu0 %v512
    %651 = vmatprep.subr.bf16.mxu0 %v515
    %652 = vmatpush1.bf16.msra.mxu0 %v514
    %653 = vmatprep.subr.bf16.mxu0 %v517
    %654 = vmatpush1.bf16.msra.mxu0 %v516
    %655 = vmatprep.subr.bf16.mxu0 %v519
    %656 = vmatpush1.bf16.msra.mxu0 %v518
    %657 = vmatprep.subr.bf16.mxu0 %v521
    %658 = vmatpush1.bf16.msra.mxu0 %v520
    %659 = vmatprep.subr.bf16.mxu0 %v523
    %660 = vmatpush1.bf16.msra.mxu0 %v522
    %661 = vmatprep.subr.bf16.mxu0 %v525
    %662 = vmatpush1.bf16.msra.mxu0 %v524
    %663 = vmatprep.subr.bf16.mxu0 %v527
    %664 = vmatpush1.bf16.msra.mxu0 %v526
    %665 = vmatprep.subr.bf16.mxu0 %v529
    %666 = vmatpush1.bf16.msra.mxu0 %v528
    %667 = vmatprep.subr.bf16.mxu0 %v531
    %668 = vmatpush1.bf16.msra.mxu0 %v530
    %669 = vmatprep.subr.bf16.mxu0 %v533
    %670 = vmatpush1.bf16.msra.mxu0 %v532
    %671 = vmatprep.subr.bf16.mxu0 %v535
    %672 = vmatpush1.bf16.msra.mxu0 %v534
    %673 = vmatprep.subr.bf16.mxu0 %v537
    %674 = vmatpush1.bf16.msra.mxu0 %v536
    %675 = vmatprep.subr.bf16.mxu0 %v539
    %676 = vmatpush1.bf16.msra.mxu0 %v538
    %677 = vmatprep.mubr.bf16.mxu0 %v207
    %678 = vmatmul.mubr.bf16.gmra.mrb[0].mxu0 %v206
    %v679 = vpop.f32.mrb[0].mxu0
    %v680 = vadd.f32 %v639, %v679
    %v681 = vpop.f32.mrb[0].mxu0
    %v682 = vadd.f32 %v641, %v681
    %v683 = vpop.f32.mrb[0].mxu0
    %v684 = vpop.f32.mrb[0].mxu0
    %685 = vdwg.mxu0
    %v686 = vmax.f32 %v680, 0.0
    %v687 = vmax.f32 %v682, 0.0
    %v688 = vpack.c.bf16 %v686, %v686
    %v689 = vpack.c.bf16 %v687, %v687
    %v690 = vld [vmem:[%s5] sm:$0xf]
    %v691 = vld [vmem:[%s5 + $0x4] sm:$0xf]
    %v692 = vld [vmem:[%s5 + $0x8] sm:$0xf]
    %v693 = vld [vmem:[%s5 + $0xc] sm:$0xf]
    %v694 = vld [vmem:[%s5 + $0x10] sm:$0xf]
    %v695 = vld [vmem:[%s5 + $0x14] sm:$0xf]
    %v696 = vld [vmem:[%s5 + $0x18] sm:$0xf]
    %v697 = vld [vmem:[%s5 + $0x1c] sm:$0xf]
    %v698 = vld [vmem:[%s5 + $0x20] sm:$0xf]
    %v699 = vld [vmem:[%s5 + $0x24] sm:$0xf]
    %v700 = vld [vmem:[%s5 + $0x28] sm:$0xf]
    %v701 = vld [vmem:[%s5 + $0x2c] sm:$0xf]
    %v702 = vld [vmem:[%s5 + $0x30] sm:$0xf]
    %v703 = vld [vmem:[%s5 + $0x34] sm:$0xf]
    %v704 = vld [vmem:[%s5 + $0x38] sm:$0xf]
    %v705 = vld [vmem:[%s5 + $0x3c] sm:$0xf]
    %v706 = vld [vmem:[%s5 + $0x40] sm:$0xf]
    %v707 = vld [vmem:[%s5 + $0x44] sm:$0xf]
    %v708 = vld [vmem:[%s5 + $0x48] sm:$0xf]
    %v709 = vld [vmem:[%s5 + $0x4c] sm:$0xf]
    %v710 = vld [vmem:[%s5 + $0x50] sm:$0xf]
    %v711 = vld [vmem:[%s5 + $0x54] sm:$0xf]
    %v712 = vld [vmem:[%s5 + $0x58] sm:$0xf]
    %v713 = vld [vmem:[%s5 + $0x5c] sm:$0xf]
    %v714 = vld [vmem:[%s5 + $0x60] sm:$0xf]
    %v715 = vld [vmem:[%s5 + $0x64] sm:$0xf]
    %v716 = vld [vmem:[%s5 + $0x68] sm:$0xf]
    %v717 = vld [vmem:[%s5 + $0x6c] sm:$0xf]
    %v718 = vld [vmem:[%s5 + $0x70] sm:$0xf]
    %v719 = vld [vmem:[%s5 + $0x74] sm:$0xf]
    %v720 = vld [vmem:[%s5 + $0x78] sm:$0xf]
    %v721 = vld [vmem:[%s5 + $0x7c] sm:$0xf]
    %v722 = vld [vmem:[%s6] sm:$0x1]
    %v724 = vlaneseq
    %v725 = vshrl.u32 %v724, 7
    %v726 = vsub.s32 0, %v725
    %v727 = vrot.slane %v722, %v726
    %v761 = vunpack.c.l.b16 %v690
    %v762 = vunpack.c.l.b16 %v691
    %v763 = vunpack.c.l.b16 %v692
    %v764 = vunpack.c.l.b16 %v693
    %v765 = vunpack.c.l.b16 %v694
    %v766 = vunpack.c.l.b16 %v695
    %v767 = vunpack.c.l.b16 %v696
    %v768 = vunpack.c.l.b16 %v697
    %v769 = vunpack.c.l.b16 %v698
    %v770 = vunpack.c.l.b16 %v699
    %v771 = vunpack.c.l.b16 %v700
    %v772 = vunpack.c.l.b16 %v701
    %v773 = vunpack.c.l.b16 %v702
    %v774 = vunpack.c.l.b16 %v703
    %v775 = vunpack.c.l.b16 %v704
    %v776 = vunpack.c.l.b16 %v705
    %v777 = vunpack.c.l.b16 %v706
    %v778 = vunpack.c.l.b16 %v707
    %v779 = vunpack.c.l.b16 %v708
    %v780 = vunpack.c.l.b16 %v709
    %v781 = vunpack.c.l.b16 %v710
    %v782 = vunpack.c.l.b16 %v711
    %v783 = vunpack.c.l.b16 %v712
    %v784 = vunpack.c.l.b16 %v713
    %v785 = vunpack.c.l.b16 %v714
    %v786 = vunpack.c.l.b16 %v715
    %v787 = vunpack.c.l.b16 %v716
    %v788 = vunpack.c.l.b16 %v717
    %v789 = vunpack.c.l.b16 %v718
    %v790 = vunpack.c.l.b16 %v719
    %v791 = vunpack.c.l.b16 %v720
    %v792 = vunpack.c.l.b16 %v721
    %v793 = vpack.c.b16 %v762, %v761
    %v794 = vpack.c.b16 %v764, %v763
    %v795 = vpack.c.b16 %v766, %v765
    %v796 = vpack.c.b16 %v768, %v767
    %v797 = vpack.c.b16 %v770, %v769
    %v798 = vpack.c.b16 %v772, %v771
    %v799 = vpack.c.b16 %v774, %v773
    %v800 = vpack.c.b16 %v776, %v775
    %v801 = vpack.c.b16 %v778, %v777
    %v802 = vpack.c.b16 %v780, %v779
    %v803 = vpack.c.b16 %v782, %v781
    %v804 = vpack.c.b16 %v784, %v783
    %v805 = vpack.c.b16 %v786, %v785
    %v806 = vpack.c.b16 %v788, %v787
    %v807 = vpack.c.b16 %v790, %v789
    %v808 = vpack.c.b16 %v792, %v791
    %825 = vmatprep.subr.bf16.mxu0 0
    %826 = vmatpush1.bf16.msra.mxu0 %v793
    %827 = vmatprep.subr.bf16.mxu0 0
    %828 = vmatpush1.bf16.msra.mxu0 %v794
    %829 = vmatprep.subr.bf16.mxu0 0
    %830 = vmatpush1.bf16.msra.mxu0 %v795
    %831 = vmatprep.subr.bf16.mxu0 0
    %832 = vmatpush1.bf16.msra.mxu0 %v796
    %833 = vmatprep.subr.bf16.mxu0 0
    %834 = vmatpush1.bf16.msra.mxu0 %v797
    %835 = vmatprep.subr.bf16.mxu0 0
    %836 = vmatpush1.bf16.msra.mxu0 %v798
    %837 = vmatprep.subr.bf16.mxu0 0
    %838 = vmatpush1.bf16.msra.mxu0 %v799
    %839 = vmatprep.subr.bf16.mxu0 0
    %840 = vmatpush1.bf16.msra.mxu0 %v800
    %841 = vmatprep.subr.bf16.mxu0 0
    %842 = vmatpush1.bf16.msra.mxu0 %v801
    %843 = vmatprep.subr.bf16.mxu0 0
    %844 = vmatpush1.bf16.msra.mxu0 %v802
    %845 = vmatprep.subr.bf16.mxu0 0
    %846 = vmatpush1.bf16.msra.mxu0 %v803
    %847 = vmatprep.subr.bf16.mxu0 0
    %848 = vmatpush1.bf16.msra.mxu0 %v804
    %849 = vmatprep.subr.bf16.mxu0 0
    %850 = vmatpush1.bf16.msra.mxu0 %v805
    %851 = vmatprep.subr.bf16.mxu0 0
    %852 = vmatpush1.bf16.msra.mxu0 %v806
    %853 = vmatprep.subr.bf16.mxu0 0
    %854 = vmatpush1.bf16.msra.mxu0 %v807
    %855 = vmatprep.subr.bf16.mxu0 0
    %856 = vmatpush1.bf16.msra.mxu0 %v808
    %857 = vmatprep.mubr.bf16.mxu0 %v689
    %858 = vmatmul.mubr.bf16.gmra.mrb[0].mxu0 %v688
    %v859 = vpop.f32.mrb[0].mxu0
    %v860 = vadd.f32 %v727, %v859
    %v861 = vpop.f32.mrb[0].mxu0
    %v862 = vpop.f32.mrb[0].mxu0
    %v863 = vpop.f32.mrb[0].mxu0
    %864 = vdwg.mxu0
    %vm865 = vcmask 64512
    %866 = vst.msk [vmem:[#allocation5] sm:$0xff] %vm865, %v860
    // Predicated region
    $region34: #{tpu_custom_call.1} parent=1 // pred_check
      _
    $region35: #{tpu_custom_call.1} parent=1 // pred_check_branch
      %868 = sbr.rel (0) target = $region37
    $region36: #{tpu_custom_call.1} parent=1 // pred_region
      %s870 = ssub.s32 128, 128
      %871 = vsyncadd [#allocation4], %s870
      %s873 = sshll.u32 [#allocation5], 4
      %s874 = int_to_ptr.vmem [resolvable:$true] %s873
      %876 = dma.vmem_to_hbm [thread:$0]  %s874, 128, %s7, [#allocation4]
    $region37: #{tpu_custom_call.1} parent=1 // pred_fallthru
      _
    // Predicated region
    $region38: #{tpu_custom_call.1} parent=1 // pred_check
      _
    $region39: #{tpu_custom_call.1} parent=1 // pred_check_branch
      %878 = sbr.rel (0) target = $region41
    $region40: #{tpu_custom_call.1} parent=1 // pred_region
      %879 = dma.done [#allocation4], 128
    $region41: #{tpu_custom_call.1} parent=1 // pred_fallthru
      _
    %880 = vsyncpa [#allocation3], 1
    %881 = vsyncpa [#allocation4], 1

</llo_original>
